<compile_context>
chip_gen: v7x
topology: tpu7x:2x2x1
jax: 0.10.0
libtpu: 0.0.40
codegen_flags: <defaults>
</compile_context>

<pallas_src>
import functools

import jax
import jax.numpy as jnp
from jax.experimental import pallas as pl
from jax.experimental.pallas import tpu as pltpu

NEG_SLOPE = 0.01  # torch.nn.LeakyReLU default negative_slope
LANE = 128


def _round_up(n, m):
    return ((n + m - 1) // m) * m


def _leaky_relu(h):
    return jnp.where(h > 0, h, NEG_SLOPE * h)


# ----------------------------------------------------------------------------
# Kernel
# ----------------------------------------------------------------------------
def discriminator_kernel(x_ref, p_ref, w_ref, out_ref, *,
                         nx, npf, hp,
                         off_w1x, off_w1p, off_b, off_w2, off_w5):
    x = x_ref[...]        # (TM, nx)
    prop = p_ref[...]     # (TM, npf)

    # ---- layer 1: cat(x, property) @ W1 + b1, concat folded into a split sum.
    #      x part on the MXU; the tiny-K property part as VPU broadcast MACs.
    acc = jnp.dot(x, w_ref[pl.ds(off_w1x, nx), :],
                  preferred_element_type=jnp.float32)          # (TM, HP)
    acc = acc + w_ref[pl.ds(off_b, 1), :]                      # + b1 (1, HP)
    for k in range(npf):                                       # K=npf (=2): VPU
        acc = acc + prop[:, k:k + 1] * w_ref[pl.ds(off_w1p + k, 1), :]
    h = _leaky_relu(acc)

    # ---- layers 2..4: (TM,HP)@(HP,HP) + b, LeakyReLU.
    #      Zero-padded rows/columns propagate harmlessly (LeakyReLU(0)=0).
    for j in range(3):
        w = w_ref[pl.ds(off_w2 + j * hp, hp), :]
        b = w_ref[pl.ds(off_b + 1 + j, 1), :]
        h = _leaky_relu(jnp.dot(h, w, preferred_element_type=jnp.float32) + b)

    # ---- layer 5: only column 0 of the padded weight / bias is meaningful.
    y = jnp.dot(h, w_ref[pl.ds(off_w5, hp), :],
                preferred_element_type=jnp.float32)
    y = y + w_ref[pl.ds(off_b + 4, 1), :]
    # Narrow (1-lane) store matches the module's (B, 1) output; only convert to
    # a lane-dense slab if profiling ever shows the vst path exposed.
    out_ref[...] = y[:, :1].astype(out_ref.dtype)


# ----------------------------------------------------------------------------
# Parameter packing: one lane-dense, 8-row-aligned f32 slab in VMEM.
# ----------------------------------------------------------------------------
def pack_params(p, nx, npf, H):
    HP = _round_up(H, LANE)               # padded hidden width (lane-dense)
    r_w1x = _round_up(nx, 8)
    r_w1p = _round_up(npf, 8)
    r_b = 8                               # 5 bias rows live in one 8-row block

    off_w1x = 0
    off_w1p = off_w1x + r_w1x
    off_b = off_w1p + r_w1p
    off_w2 = off_b + r_b
    off_w5 = off_w2 + 3 * HP
    R = off_w5 + HP

    slab = jnp.zeros((R, HP), jnp.float32)
    slab = slab.at[off_w1x:off_w1x + nx, :H].set(p["w1"][:nx])
    slab = slab.at[off_w1p:off_w1p + npf, :H].set(p["w1"][nx:])
    slab = slab.at[off_b + 0, :H].set(p["b1"])
    slab = slab.at[off_b + 1, :H].set(p["b2"])
    slab = slab.at[off_b + 2, :H].set(p["b3"])
    slab = slab.at[off_b + 3, :H].set(p["b4"])
    slab = slab.at[off_b + 4, :1].set(p["b5"])
    slab = slab.at[off_w2 + 0 * HP:off_w2 + 0 * HP + H, :H].set(p["w2"])
    slab = slab.at[off_w2 + 1 * HP:off_w2 + 1 * HP + H, :H].set(p["w3"])
    slab = slab.at[off_w2 + 2 * HP:off_w2 + 2 * HP + H, :H].set(p["w4"])
    slab = slab.at[off_w5:off_w5 + H, :1].set(p["w5"])

    meta = dict(HP=HP, R=R, off_w1x=off_w1x, off_w1p=off_w1p,
                off_b=off_b, off_w2=off_w2, off_w5=off_w5)
    return slab, meta


# ----------------------------------------------------------------------------
# Wrapper: batch gridded over TM-row tiles, weights VMEM-resident.
# ----------------------------------------------------------------------------
def discriminator_forward(x, prop, packed, meta, *, tm=512):
    B, nx = x.shape
    npf = prop.shape[1]
    HP, R = meta["HP"], meta["R"]

    TM = min(tm, _round_up(B, 8))         # row tile (multiple of 8 sublanes)
    Bp = _round_up(B, TM)                 # pad batch to a TM multiple
    if Bp != B:
        x = jnp.pad(x, ((0, Bp - B), (0, 0)))
        prop = jnp.pad(prop, ((0, Bp - B), (0, 0)))
    grid = (Bp // TM,)

    kernel = functools.partial(
        discriminator_kernel, nx=nx, npf=npf, hp=HP,
        off_w1x=meta["off_w1x"], off_w1p=meta["off_w1p"],
        off_b=meta["off_b"], off_w2=meta["off_w2"], off_w5=meta["off_w5"])

    out = pl.pallas_call(
        kernel,
        out_shape=jax.ShapeDtypeStruct((Bp, 1), jnp.float32),
        grid_spec=pltpu.PrefetchScalarGridSpec(
            num_scalar_prefetch=0,
            grid=grid,
            in_specs=[
                pl.BlockSpec((TM, nx), lambda i: (i, 0)),     # x tile
                pl.BlockSpec((TM, npf), lambda i: (i, 0)),    # property tile
                # Packed weights: constant block index -> stays resident in
                # VMEM across grid steps (no per-step re-DMA).
                pl.BlockSpec((R, HP), lambda i: (0, 0)),
            ],
            out_specs=pl.BlockSpec((TM, 1), lambda i: (i, 0)),
        ),
        compiler_params=pltpu.CompilerParams(
            dimension_semantics=("parallel",)),   # data-parallel batch axis
    )(x, prop, packed)
    return out[:B]


# ----------------------------------------------------------------------------
# Synthetic init + pure-JAX reference (PyTorch semantics)
# ----------------------------------------------------------------------------
def init_params(key, nx, npf, H):
    in_len = nx + npf
    dims = [(in_len, H), (H, H), (H, H), (H, H), (H, 1)]
    keys = jax.random.split(key, 5)
    p = {}
    for i, (fi, fo) in enumerate(dims, start=1):
        kw_, kb_ = jax.random.split(keys[i - 1])
        s = 1.0 / jnp.sqrt(jnp.float32(fi))
        p[f"w{i}"] = jax.random.uniform(kw_, (fi, fo), jnp.float32, -s, s)
        p[f"b{i}"] = jax.random.uniform(kb_, (fo,), jnp.float32, -s, s)
    return p


def reference_forward(x, prop, p):
    h = jnp.concatenate([x, prop], axis=1)
    h = _leaky_relu(h @ p["w1"] + p["b1"])
    h = _leaky_relu(h @ p["w2"] + p["b2"])
    h = _leaky_relu(h @ p["w3"] + p["b3"])
    h = _leaky_relu(h @ p["w4"] + p["b4"])
    return h @ p["w5"] + p["b5"]


if __name__ == "__main__":
    nx, npf, H = 16, 2, 64          # input_length = nx + npf = 18, hidden_size = 64

    key = jax.random.PRNGKey(0)
    kx, kp, kw = jax.random.split(key, 3)
    params = init_params(kw, nx, npf, H)
    packed, meta = pack_params(params, nx, npf, H)

    # Small demo batch (single grid step).
    B = 16
    x = jax.random.normal(kx, (B, nx), jnp.float32)
    prop = jax.random.normal(kp, (B, npf), jnp.float32)
    out = jax.block_until_ready(discriminator_forward(x, prop, packed, meta))
    ref = reference_forward(x, prop, params)
    assert out.shape == (B, 1)
    assert jnp.allclose(out, ref, atol=1e-4, rtol=1e-4), "mismatch vs reference (small)"

    # Larger, non-multiple-of-tile batch: exercises padding + multi-step grid.
    B2 = 1040
    x2 = jax.random.normal(kx, (B2, nx), jnp.float32)
    prop2 = jax.random.normal(kp, (B2, npf), jnp.float32)
    out2 = jax.block_until_ready(discriminator_forward(x2, prop2, packed, meta))
    ref2 = reference_forward(x2, prop2, params)
    assert out2.shape == (B2, 1)
    assert jnp.allclose(out2, ref2, atol=1e-4, rtol=1e-4), "mismatch vs reference (gridded)"

    print("KERNEL_OK")
</pallas_src>

<mosaic_0001>
module attributes {stable_mosaic.version = 11 : i64} {
  func.func @discriminator_kernel(%arg0: i32, %arg1: memref<16x16xf32, #tpu.memory_space<vmem>>, %arg2: memref<16x2xf32, #tpu.memory_space<vmem>>, %arg3: memref<544x128xf32, #tpu.memory_space<vmem>>, %arg4: memref<16x1xf32, #tpu.memory_space<vmem>>) attributes {dimension_semantics = [#tpu.dimension_semantics<parallel>], iteration_bounds = array<i64: 1>, scalar_prefetch = 0 : i64, scratch_operands = 0 : i64, tpu.core_type = #tpu.core_type<tc>, window_params = [{transform_indices = @transform_0, window_bounds = array<i64: 16, 16>}, {transform_indices = @transform_1, window_bounds = array<i64: 16, 2>}, {pipeline_mode = #tpu.pipeline_mode<synchronous>, transform_indices = @transform_2, window_bounds = array<i64: 544, 128>}, {transform_indices = @transform_3, window_bounds = array<i64: 16, 1>}]} {
    %c0 = arith.constant 0 : index
    %c0_0 = arith.constant 0 : index
    %0 = vector.load %arg1[%c0, %c0_0] : memref<16x16xf32, #tpu.memory_space<vmem>>, vector<16x16xf32>
    %c0_1 = arith.constant 0 : index
    %c0_2 = arith.constant 0 : index
    %1 = vector.load %arg2[%c0_1, %c0_2] : memref<16x2xf32, #tpu.memory_space<vmem>>, vector<16x2xf32>
    %c0_3 = arith.constant 0 : index
    %c0_4 = arith.constant 0 : index
    %2 = vector.load %arg3[%c0_3, %c0_4] : memref<544x128xf32, #tpu.memory_space<vmem>>, vector<16x128xf32>
    %cst = arith.constant dense<0.000000e+00> : vector<16x128xf32>
    %3 = tpu.matmul %0, %2, %cst {dimension_numbers = #tpu.dot_dimension_numbers<[1], [0], [0], [1], [0, 0, 1, 1], [], []>} : vector<16x16xf32>, vector<16x128xf32>, vector<16x128xf32> -> vector<16x128xf32>
    %c24 = arith.constant 24 : index
    %c0_5 = arith.constant 0 : index
    %4 = vector.load %arg3[%c24, %c0_5] : memref<544x128xf32, #tpu.memory_space<vmem>>, vector<1x128xf32>
    %5 = vector.broadcast %4 : vector<1x128xf32> to vector<16x128xf32>
    %6 = arith.addf %3, %5 : vector<16x128xf32>
    %7 = vector.extract_strided_slice %1 {offsets = [0, 0], sizes = [16, 1], strides = [1, 1]} : vector<16x2xf32> to vector<16x1xf32>
    %c16 = arith.constant 16 : index
    %c0_6 = arith.constant 0 : index
    %8 = vector.load %arg3[%c16, %c0_6] : memref<544x128xf32, #tpu.memory_space<vmem>>, vector<1x128xf32>
    %9 = vector.broadcast %7 : vector<16x1xf32> to vector<16x128xf32>
    %10 = vector.broadcast %8 : vector<1x128xf32> to vector<16x128xf32>
    %11 = arith.mulf %9, %10 : vector<16x128xf32>
    %12 = arith.addf %6, %11 : vector<16x128xf32>
    %13 = vector.extract_strided_slice %1 {offsets = [0, 1], sizes = [16, 1], strides = [1, 1]} : vector<16x2xf32> to vector<16x1xf32>
    %c17 = arith.constant 17 : index
    %c0_7 = arith.constant 0 : index
    %14 = vector.load %arg3[%c17, %c0_7] : memref<544x128xf32, #tpu.memory_space<vmem>>, vector<1x128xf32>
    %15 = vector.broadcast %13 : vector<16x1xf32> to vector<16x128xf32>
    %16 = vector.broadcast %14 : vector<1x128xf32> to vector<16x128xf32>
    %17 = arith.mulf %15, %16 : vector<16x128xf32>
    %18 = arith.addf %12, %17 : vector<16x128xf32>
    %cst_8 = arith.constant 0.000000e+00 : f32
    %19 = vector.broadcast %cst_8 : f32 to vector<16x128xf32>
    %20 = arith.cmpf ogt, %18, %19 : vector<16x128xf32>
    %cst_9 = arith.constant 0.00999999977 : f32
    %21 = vector.broadcast %cst_9 : f32 to vector<16x128xf32>
    %22 = arith.mulf %21, %18 : vector<16x128xf32>
    %23 = arith.select %20, %18, %22 : vector<16x128xi1>, vector<16x128xf32>
    %c32 = arith.constant 32 : index
    %c0_10 = arith.constant 0 : index
    %24 = vector.load %arg3[%c32, %c0_10] : memref<544x128xf32, #tpu.memory_space<vmem>>, vector<128x128xf32>
    %c25 = arith.constant 25 : index
    %c0_11 = arith.constant 0 : index
    %25 = vector.load %arg3[%c25, %c0_11] : memref<544x128xf32, #tpu.memory_space<vmem>>, vector<1x128xf32>
    %cst_12 = arith.constant dense<0.000000e+00> : vector<16x128xf32>
    %26 = tpu.matmul %23, %24, %cst_12 {dimension_numbers = #tpu.dot_dimension_numbers<[1], [0], [0], [1], [0, 0, 1, 1], [], []>} : vector<16x128xf32>, vector<128x128xf32>, vector<16x128xf32> -> vector<16x128xf32>
    %27 = vector.broadcast %25 : vector<1x128xf32> to vector<16x128xf32>
    %28 = arith.addf %26, %27 : vector<16x128xf32>
    %cst_13 = arith.constant 0.000000e+00 : f32
    %29 = vector.broadcast %cst_13 : f32 to vector<16x128xf32>
    %30 = arith.cmpf ogt, %28, %29 : vector<16x128xf32>
    %cst_14 = arith.constant 0.00999999977 : f32
    %31 = vector.broadcast %cst_14 : f32 to vector<16x128xf32>
    %32 = arith.mulf %31, %28 : vector<16x128xf32>
    %33 = arith.select %30, %28, %32 : vector<16x128xi1>, vector<16x128xf32>
    %c160 = arith.constant 160 : index
    %c0_15 = arith.constant 0 : index
    %34 = vector.load %arg3[%c160, %c0_15] : memref<544x128xf32, #tpu.memory_space<vmem>>, vector<128x128xf32>
    %c26 = arith.constant 26 : index
    %c0_16 = arith.constant 0 : index
    %35 = vector.load %arg3[%c26, %c0_16] : memref<544x128xf32, #tpu.memory_space<vmem>>, vector<1x128xf32>
    %cst_17 = arith.constant dense<0.000000e+00> : vector<16x128xf32>
    %36 = tpu.matmul %33, %34, %cst_17 {dimension_numbers = #tpu.dot_dimension_numbers<[1], [0], [0], [1], [0, 0, 1, 1], [], []>} : vector<16x128xf32>, vector<128x128xf32>, vector<16x128xf32> -> vector<16x128xf32>
    %37 = vector.broadcast %35 : vector<1x128xf32> to vector<16x128xf32>
    %38 = arith.addf %36, %37 : vector<16x128xf32>
    %cst_18 = arith.constant 0.000000e+00 : f32
    %39 = vector.broadcast %cst_18 : f32 to vector<16x128xf32>
    %40 = arith.cmpf ogt, %38, %39 : vector<16x128xf32>
    %cst_19 = arith.constant 0.00999999977 : f32
    %41 = vector.broadcast %cst_19 : f32 to vector<16x128xf32>
    %42 = arith.mulf %41, %38 : vector<16x128xf32>
    %43 = arith.select %40, %38, %42 : vector<16x128xi1>, vector<16x128xf32>
    %c288 = arith.constant 288 : index
    %c0_20 = arith.constant 0 : index
    %44 = vector.load %arg3[%c288, %c0_20] : memref<544x128xf32, #tpu.memory_space<vmem>>, vector<128x128xf32>
    %c27 = arith.constant 27 : index
    %c0_21 = arith.constant 0 : index
    %45 = vector.load %arg3[%c27, %c0_21] : memref<544x128xf32, #tpu.memory_space<vmem>>, vector<1x128xf32>
    %cst_22 = arith.constant dense<0.000000e+00> : vector<16x128xf32>
    %46 = tpu.matmul %43, %44, %cst_22 {dimension_numbers = #tpu.dot_dimension_numbers<[1], [0], [0], [1], [0, 0, 1, 1], [], []>} : vector<16x128xf32>, vector<128x128xf32>, vector<16x128xf32> -> vector<16x128xf32>
    %47 = vector.broadcast %45 : vector<1x128xf32> to vector<16x128xf32>
    %48 = arith.addf %46, %47 : vector<16x128xf32>
    %cst_23 = arith.constant 0.000000e+00 : f32
    %49 = vector.broadcast %cst_23 : f32 to vector<16x128xf32>
    %50 = arith.cmpf ogt, %48, %49 : vector<16x128xf32>
    %cst_24 = arith.constant 0.00999999977 : f32
    %51 = vector.broadcast %cst_24 : f32 to vector<16x128xf32>
    %52 = arith.mulf %51, %48 : vector<16x128xf32>
    %53 = arith.select %50, %48, %52 : vector<16x128xi1>, vector<16x128xf32>
    %c416 = arith.constant 416 : index
    %c0_25 = arith.constant 0 : index
    %54 = vector.load %arg3[%c416, %c0_25] : memref<544x128xf32, #tpu.memory_space<vmem>>, vector<128x128xf32>
    %cst_26 = arith.constant dense<0.000000e+00> : vector<16x128xf32>
    %55 = tpu.matmul %53, %54, %cst_26 {dimension_numbers = #tpu.dot_dimension_numbers<[1], [0], [0], [1], [0, 0, 1, 1], [], []>} : vector<16x128xf32>, vector<128x128xf32>, vector<16x128xf32> -> vector<16x128xf32>
    %c28 = arith.constant 28 : index
    %c0_27 = arith.constant 0 : index
    %56 = vector.load %arg3[%c28, %c0_27] : memref<544x128xf32, #tpu.memory_space<vmem>>, vector<1x128xf32>
    %57 = vector.broadcast %56 : vector<1x128xf32> to vector<16x128xf32>
    %58 = arith.addf %55, %57 : vector<16x128xf32>
    %59 = vector.extract_strided_slice %58 {offsets = [0, 0], sizes = [16, 1], strides = [1, 1]} : vector<16x128xf32> to vector<16x1xf32>
    %c0_28 = arith.constant 0 : index
    %c0_29 = arith.constant 0 : index
    %60 = vector.load %arg4[%c0_28, %c0_29] : memref<16x1xf32, #tpu.memory_space<vmem>>, vector<16x1xf32>
    tpu.vector_store %arg4[%c0_28, %c0_29], %59 {strides = array<i32>} : memref<16x1xf32, #tpu.memory_space<vmem>>, vector<16x1xf32>,
    return
  }
  func.func @transform_0(%arg0: i32) -> (i32, i32) {
    %c0_i32 = arith.constant 0 : i32
    %c0_i32_0 = arith.constant 0 : i32
    return %arg0, %c0_i32 : i32, i32
  }
  func.func @transform_1(%arg0: i32) -> (i32, i32) {
    %c0_i32 = arith.constant 0 : i32
    %c0_i32_0 = arith.constant 0 : i32
    return %arg0, %c0_i32 : i32, i32
  }
  func.func @transform_2(%arg0: i32) -> (i32, i32) {
    %c0_i32 = arith.constant 0 : i32
    %c0_i32_0 = arith.constant 0 : i32
    %c0_i32_1 = arith.constant 0 : i32
    return %c0_i32, %c0_i32_0 : i32, i32
  }
  func.func @transform_3(%arg0: i32) -> (i32, i32) {
    %c0_i32 = arith.constant 0 : i32
    %c0_i32_0 = arith.constant 0 : i32
    return %arg0, %c0_i32 : i32, i32
  }
}

</mosaic_0001>

<llo_original>
// kernel: tpu_custom_call.1
$region0: #{tpu_custom_call.1}
  #allocation0 [shape = 'u32[]', space=smem, size = 0x4, offset = 0x4, fixed_abs, tag = 'smem constant byte address 0x4 - core index']
  #allocation1 [shape = 'u32[144,128]{1,0:T(1,128)}', space=vmem, size = 0x12000, scoped, tag = 'internal scratch']
  %s0 = inlined_call_operand.vmem [shape: f32[16,16], index: 0, kind: input, shape index: {}]
  %s1 = inlined_call_operand.vmem [shape: f32[16,2], index: 1, kind: input, shape index: {}]
  %s2 = inlined_call_operand.hbm [shape: f32[544,128], index: 2, kind: input, shape index: {}]
  %s3 = inlined_call_operand.vmem [shape: f32[16,1], index: 3, kind: output, shape index: {}]
  %s4 = sld [smem:[#allocation0]]
  $region26: #{tpu_custom_call.1} parent=0
    _
  %s6 = ssub.s32 1, %s4
  %s7 = scalar_select 0, %s6, %s4
  $region1: #{tpu_custom_call.1} parent=0
    #allocation2 [shape = 'u8[278528]{0}', space=vmem, size = 0x44000, scoped, tag = 'input window, operand 2, single buffered']
    #allocation3 [shape = 's32[1]{0}', space=sflag, size = 0x4, scoped, tag = 'scoped memory for tpu_custom_call.1']
    %8 = vsyncpa [#allocation3], 0
    // Predicated region
    $region2: #{tpu_custom_call.1} parent=1 // pred_check
      _
    $region3: #{tpu_custom_call.1} parent=1 // pred_check_branch
      %10 = sbr.rel (0) target = $region5
    $region4: #{tpu_custom_call.1} parent=1 // pred_region
      _
    $region5: #{tpu_custom_call.1} parent=1 // pred_fallthru
      _
    // Predicated region
    $region6: #{tpu_custom_call.1} parent=1 // pred_check
      _
    $region7: #{tpu_custom_call.1} parent=1 // pred_check_branch
      %12 = sbr.rel (0) target = $region9
    $region8: #{tpu_custom_call.1} parent=1 // pred_region
      _
    $region9: #{tpu_custom_call.1} parent=1 // pred_fallthru
      _
    // Predicated region
    $region10: #{tpu_custom_call.1} parent=1 // pred_check
      _
    $region11: #{tpu_custom_call.1} parent=1 // pred_check_branch
      %14 = sbr.rel (0) target = $region13
    $region12: #{tpu_custom_call.1} parent=1 // pred_region
      %s16 = ssub.s32 8704, 8704
      %17 = vsyncadd [#allocation3], %s16
      %s18 = sshll.u32 [#allocation2], 4
      %s19 = int_to_ptr.vmem [resolvable:$true] %s18
      %24 = dma.hbm_to_vmem [thread:$0]  %s2, 8704, %s19, [#allocation3], 128, 128, 8
    $region13: #{tpu_custom_call.1} parent=1 // pred_fallthru
      _
    // Predicated region
    $region14: #{tpu_custom_call.1} parent=1 // pred_check
      _
    $region15: #{tpu_custom_call.1} parent=1 // pred_check_branch
      %26 = sbr.rel (0) target = $region17
    $region16: #{tpu_custom_call.1} parent=1 // pred_region
      %27 = dma.done [#allocation3], 8704
    $region17: #{tpu_custom_call.1} parent=1 // pred_fallthru
      _
    %v28 = vld [vmem:[%s0] sm:$0xff]
    %v29 = vld [vmem:[%s0 + $0x8] sm:$0xff]
    %v30 = vld [vmem:[%s1] sm:$0xff]
    %v31 = vld [vmem:[%s1 + $0x8] sm:$0xff]
    %v32 = vld [vmem:[#allocation2] sm:$0xff]
    %v33 = vld [vmem:[#allocation2 + $0x8] sm:$0xff]
    %v34 = vld [vmem:[#allocation2 + $0x18] sm:$0x1]
    %v35 = vlaneseq
    %v36 = vshrl.u32 %v35, 7
    %v37 = vsub.s32 0, %v36
    %v38 = vrot.slane %v34, %v37
    %vm39 = vcmask 130048
    %v41 = vsel %vm39, %v28, 0
    %v44 = vsel %vm39, %v29, 0
    %46 = vmatprep.subr.mxu0 0.0
    %47 = vmatpush1.msra.mxu0 %v32
    %48 = vmatprep.subr.mxu0 0.0
    %49 = vmatpush1.msra.mxu0 %v33
    %50 = vmatprep.subr.mxu0 0.0
    %51 = vmatpush1.msra.mxu0 0.0
    %52 = vmatprep.subr.mxu0 0.0
    %53 = vmatpush1.msra.mxu0 0.0
    %54 = vmatprep.subr.mxu0 0.0
    %55 = vmatpush1.msra.mxu0 0.0
    %56 = vmatprep.subr.mxu0 0.0
    %57 = vmatpush1.msra.mxu0 0.0
    %58 = vmatprep.subr.mxu0 0.0
    %59 = vmatpush1.msra.mxu0 0.0
    %60 = vmatprep.subr.mxu0 0.0
    %61 = vmatpush1.msra.mxu0 0.0
    %62 = vmatprep.subr.mxu0 0.0
    %63 = vmatpush1.msra.mxu0 0.0
    %64 = vmatprep.subr.mxu0 0.0
    %65 = vmatpush1.msra.mxu0 0.0
    %66 = vmatprep.subr.mxu0 0.0
    %67 = vmatpush1.msra.mxu0 0.0
    %68 = vmatprep.subr.mxu0 0.0
    %69 = vmatpush1.msra.mxu0 0.0
    %70 = vmatprep.subr.mxu0 0.0
    %71 = vmatpush1.msra.mxu0 0.0
    %72 = vmatprep.subr.mxu0 0.0
    %73 = vmatpush1.msra.mxu0 0.0
    %74 = vmatprep.subr.mxu0 0.0
    %75 = vmatpush1.msra.mxu0 0.0
    %76 = vmatprep.subr.mxu0 0.0
    %77 = vmatpush1.msra.mxu0 0.0
    %78 = vmatprep.subr.mxu0 0.0
    %79 = vmatpush1.msra.mxu0 0.0
    %80 = vmatprep.subr.mxu0 0.0
    %81 = vmatpush1.msra.mxu0 0.0
    %82 = vmatprep.subr.mxu0 0.0
    %83 = vmatpush1.msra.mxu0 0.0
    %84 = vmatprep.subr.mxu0 0.0
    %85 = vmatpush1.msra.mxu0 0.0
    %86 = vmatprep.subr.mxu0 0.0
    %87 = vmatpush1.msra.mxu0 0.0
    %88 = vmatprep.subr.mxu0 0.0
    %89 = vmatpush1.msra.mxu0 0.0
    %90 = vmatprep.subr.mxu0 0.0
    %91 = vmatpush1.msra.mxu0 0.0
    %92 = vmatprep.subr.mxu0 0.0
    %93 = vmatpush1.msra.mxu0 0.0
    %94 = vmatprep.subr.mxu0 0.0
    %95 = vmatpush1.msra.mxu0 0.0
    %96 = vmatprep.subr.mxu0 0.0
    %97 = vmatpush1.msra.mxu0 0.0
    %98 = vmatprep.subr.mxu0 0.0
    %99 = vmatpush1.msra.mxu0 0.0
    %100 = vmatprep.subr.mxu0 0.0
    %101 = vmatpush1.msra.mxu0 0.0
    %102 = vmatprep.subr.mxu0 0.0
    %103 = vmatpush1.msra.mxu0 0.0
    %104 = vmatprep.subr.mxu0 0.0
    %105 = vmatpush1.msra.mxu0 0.0
    %106 = vmatprep.subr.mxu0 0.0
    %107 = vmatpush1.msra.mxu0 0.0
    %108 = vmatprep.subr.mxu0 0.0
    %109 = vmatpush1.msra.mxu0 0.0
    %110 = vmatprep.mubr.f32.mxu0 0.0
    %111 = vmatmul.mubr.f32.gmra.mrb[0].mxu0 %v41
    %v112 = vpop.f32.mrb[0].mxu0
    %v113 = vadd.f32 %v38, %v112
    %v114 = vpop.f32.mrb[0].mxu0
    %115 = vmatprep.mubr.f32.mxu0 0.0
    %116 = vmatmul.mubr.f32.gmra.mrb[0].mxu0 %v44
    %v117 = vpop.f32.mrb[0].mxu0
    %v118 = vadd.f32 %v38, %v117
    %v119 = vpop.f32.mrb[0].mxu0
    %120 = vdwg.mxu0
    %v121 = vld [vmem:[#allocation2 + $0x10] sm:$0x1]
    %123 = vset.pattern.permute.xlu0 0
    %124 = vperm.xlu0 %123, %v30
    %v125 = vpop.permute.xlu0 %124
    %128 = vset.pattern.permute.xlu0 0
    %129 = vperm.xlu0 %128, %v31
    %v130 = vpop.permute.xlu0 %129
    %v132 = vlaneseq
    %v133 = vshrl.u32 %v132, 7
    %v134 = vsub.s32 0, %v133
    %v135 = vrot.slane %v121, %v134
    %v136 = vmul.f32 %v125, %v135
    %v137 = vmul.f32 %v130, %v135
    %v138 = vadd.f32 %v113, %v136
    %v139 = vadd.f32 %v118, %v137
    %v140 = vld [vmem:[#allocation2 + $0x11] sm:$0x1]
    %141 = vset.pattern.permute.xlu0 1
    %142 = vperm.xlu0 %141, %v30
    %v143 = vpop.permute.xlu0 %142
    %145 = vset.pattern.permute.xlu0 1
    %146 = vperm.xlu0 %145, %v31
    %v147 = vpop.permute.xlu0 %146
    %v149 = vlaneseq
    %v150 = vshrl.u32 %v149, 7
    %v151 = vsub.s32 0, %v150
    %v152 = vrot.slane %v140, %v151
    %v153 = vmul.f32 %v143, %v152
    %v154 = vmul.f32 %v147, %v152
    %v155 = vadd.f32 %v138, %v153
    %v156 = vadd.f32 %v139, %v154
    %vm157 = vcmp.gt.f32.partialorder %v155, 0.0
    %vm158 = vcmp.gt.f32.partialorder %v156, 0.0
    %v159 = vmul.f32 %v155, 0.01
    %v160 = vmul.f32 %v156, 0.01
    %v161 = vsel %vm157, %v155, %v159
    %v162 = vsel %vm158, %v156, %v160
    %v163 = vld [vmem:[#allocation2 + $0x20] sm:$0xff]
    %v164 = vld [vmem:[#allocation2 + $0x28] sm:$0xff]
    %v165 = vld [vmem:[#allocation2 + $0x30] sm:$0xff]
    %v166 = vld [vmem:[#allocation2 + $0x38] sm:$0xff]
    %v167 = vld [vmem:[#allocation2 + $0x40] sm:$0xff]
    %v168 = vld [vmem:[#allocation2 + $0x48] sm:$0xff]
    %v169 = vld [vmem:[#allocation2 + $0x50] sm:$0xff]
    %v170 = vld [vmem:[#allocation2 + $0x58] sm:$0xff]
    %v171 = vld [vmem:[#allocation2 + $0x60] sm:$0xff]
    %v172 = vld [vmem:[#allocation2 + $0x68] sm:$0xff]
    %v173 = vld [vmem:[#allocation2 + $0x70] sm:$0xff]
    %v174 = vld [vmem:[#allocation2 + $0x78] sm:$0xff]
    %v175 = vld [vmem:[#allocation2 + $0x80] sm:$0xff]
    %v176 = vld [vmem:[#allocation2 + $0x88] sm:$0xff]
    %v177 = vld [vmem:[#allocation2 + $0x90] sm:$0xff]
    %v178 = vld [vmem:[#allocation2 + $0x98] sm:$0xff]
    %v179 = vld [vmem:[#allocation2 + $0x19] sm:$0x1]
    %v180 = vlaneseq
    %v181 = vshrl.u32 %v180, 7
    %v182 = vsub.s32 0, %v181
    %v183 = vrot.slane %v179, %v182
    %184 = vmatprep.subr.mxu0 0.0
    %185 = vmatpush1.msra.mxu0 %v163
    %186 = vmatprep.subr.mxu0 0.0
    %187 = vmatpush1.msra.mxu0 %v164
    %188 = vmatprep.subr.mxu0 0.0
    %189 = vmatpush1.msra.mxu0 %v165
    %190 = vmatprep.subr.mxu0 0.0
    %191 = vmatpush1.msra.mxu0 %v166
    %192 = vmatprep.subr.mxu0 0.0
    %193 = vmatpush1.msra.mxu0 %v167
    %194 = vmatprep.subr.mxu0 0.0
    %195 = vmatpush1.msra.mxu0 %v168
    %196 = vmatprep.subr.mxu0 0.0
    %197 = vmatpush1.msra.mxu0 %v169
    %198 = vmatprep.subr.mxu0 0.0
    %199 = vmatpush1.msra.mxu0 %v170
    %200 = vmatprep.subr.mxu0 0.0
    %201 = vmatpush1.msra.mxu0 %v171
    %202 = vmatprep.subr.mxu0 0.0
    %203 = vmatpush1.msra.mxu0 %v172
    %204 = vmatprep.subr.mxu0 0.0
    %205 = vmatpush1.msra.mxu0 %v173
    %206 = vmatprep.subr.mxu0 0.0
    %207 = vmatpush1.msra.mxu0 %v174
    %208 = vmatprep.subr.mxu0 0.0
    %209 = vmatpush1.msra.mxu0 %v175
    %210 = vmatprep.subr.mxu0 0.0
    %211 = vmatpush1.msra.mxu0 %v176
    %212 = vmatprep.subr.mxu0 0.0
    %213 = vmatpush1.msra.mxu0 %v177
    %214 = vmatprep.subr.mxu0 0.0
    %215 = vmatpush1.msra.mxu0 %v178
    %216 = vmatprep.subr.mxu0 0.0
    %217 = vmatpush1.msra.mxu0 0.0
    %218 = vmatprep.subr.mxu0 0.0
    %219 = vmatpush1.msra.mxu0 0.0
    %220 = vmatprep.subr.mxu0 0.0
    %221 = vmatpush1.msra.mxu0 0.0
    %222 = vmatprep.subr.mxu0 0.0
    %223 = vmatpush1.msra.mxu0 0.0
    %224 = vmatprep.subr.mxu0 0.0
    %225 = vmatpush1.msra.mxu0 0.0
    %226 = vmatprep.subr.mxu0 0.0
    %227 = vmatpush1.msra.mxu0 0.0
    %228 = vmatprep.subr.mxu0 0.0
    %229 = vmatpush1.msra.mxu0 0.0
    %230 = vmatprep.subr.mxu0 0.0
    %231 = vmatpush1.msra.mxu0 0.0
    %232 = vmatprep.subr.mxu0 0.0
    %233 = vmatpush1.msra.mxu0 0.0
    %234 = vmatprep.subr.mxu0 0.0
    %235 = vmatpush1.msra.mxu0 0.0
    %236 = vmatprep.subr.mxu0 0.0
    %237 = vmatpush1.msra.mxu0 0.0
    %238 = vmatprep.subr.mxu0 0.0
    %239 = vmatpush1.msra.mxu0 0.0
    %240 = vmatprep.subr.mxu0 0.0
    %241 = vmatpush1.msra.mxu0 0.0
    %242 = vmatprep.subr.mxu0 0.0
    %243 = vmatpush1.msra.mxu0 0.0
    %244 = vmatprep.subr.mxu0 0.0
    %245 = vmatpush1.msra.mxu0 0.0
    %246 = vmatprep.subr.mxu0 0.0
    %247 = vmatpush1.msra.mxu0 0.0
    %248 = vmatprep.mubr.f32.mxu0 0.0
    %249 = vmatmul.mubr.f32.gmra.mrb[0].mxu0 %v161
    %v250 = vpop.f32.mrb[0].mxu0
    %v251 = vadd.f32 %v183, %v250
    %v252 = vpop.f32.mrb[0].mxu0
    %253 = vmatprep.mubr.f32.mxu0 0.0
    %254 = vmatmul.mubr.f32.gmra.mrb[0].mxu0 %v162
    %v255 = vpop.f32.mrb[0].mxu0
    %v256 = vadd.f32 %v183, %v255
    %v257 = vpop.f32.mrb[0].mxu0
    %258 = vdwg.mxu0
    %vm259 = vcmp.gt.f32.partialorder %v251, 0.0
    %vm260 = vcmp.gt.f32.partialorder %v256, 0.0
    %v261 = vmul.f32 %v251, 0.01
    %v262 = vmul.f32 %v256, 0.01
    %v263 = vsel %vm259, %v251, %v261
    %v264 = vsel %vm260, %v256, %v262
    %v265 = vld [vmem:[#allocation2 + $0xa0] sm:$0xff]
    %v266 = vld [vmem:[#allocation2 + $0xa8] sm:$0xff]
    %v267 = vld [vmem:[#allocation2 + $0xb0] sm:$0xff]
    %v268 = vld [vmem:[#allocation2 + $0xb8] sm:$0xff]
    %v269 = vld [vmem:[#allocation2 + $0xc0] sm:$0xff]
    %v270 = vld [vmem:[#allocation2 + $0xc8] sm:$0xff]
    %v271 = vld [vmem:[#allocation2 + $0xd0] sm:$0xff]
    %v272 = vld [vmem:[#allocation2 + $0xd8] sm:$0xff]
    %v273 = vld [vmem:[#allocation2 + $0xe0] sm:$0xff]
    %v274 = vld [vmem:[#allocation2 + $0xe8] sm:$0xff]
    %v275 = vld [vmem:[#allocation2 + $0xf0] sm:$0xff]
    %v276 = vld [vmem:[#allocation2 + $0xf8] sm:$0xff]
    %v277 = vld [vmem:[#allocation2 + $0x100] sm:$0xff]
    %v278 = vld [vmem:[#allocation2 + $0x108] sm:$0xff]
    %v279 = vld [vmem:[#allocation2 + $0x110] sm:$0xff]
    %v280 = vld [vmem:[#allocation2 + $0x118] sm:$0xff]
    %v281 = vld [vmem:[#allocation2 + $0x1a] sm:$0x1]
    %v282 = vlaneseq
    %v283 = vshrl.u32 %v282, 7
    %v284 = vsub.s32 0, %v283
    %v285 = vrot.slane %v281, %v284
    %286 = vmatprep.subr.mxu0 0.0
    %287 = vmatpush1.msra.mxu0 %v265
    %288 = vmatprep.subr.mxu0 0.0
    %289 = vmatpush1.msra.mxu0 %v266
    %290 = vmatprep.subr.mxu0 0.0
    %291 = vmatpush1.msra.mxu0 %v267
    %292 = vmatprep.subr.mxu0 0.0
    %293 = vmatpush1.msra.mxu0 %v268
    %294 = vmatprep.subr.mxu0 0.0
    %295 = vmatpush1.msra.mxu0 %v269
    %296 = vmatprep.subr.mxu0 0.0
    %297 = vmatpush1.msra.mxu0 %v270
    %298 = vmatprep.subr.mxu0 0.0
    %299 = vmatpush1.msra.mxu0 %v271
    %300 = vmatprep.subr.mxu0 0.0
    %301 = vmatpush1.msra.mxu0 %v272
    %302 = vmatprep.subr.mxu0 0.0
    %303 = vmatpush1.msra.mxu0 %v273
    %304 = vmatprep.subr.mxu0 0.0
    %305 = vmatpush1.msra.mxu0 %v274
    %306 = vmatprep.subr.mxu0 0.0
    %307 = vmatpush1.msra.mxu0 %v275
    %308 = vmatprep.subr.mxu0 0.0
    %309 = vmatpush1.msra.mxu0 %v276
    %310 = vmatprep.subr.mxu0 0.0
    %311 = vmatpush1.msra.mxu0 %v277
    %312 = vmatprep.subr.mxu0 0.0
    %313 = vmatpush1.msra.mxu0 %v278
    %314 = vmatprep.subr.mxu0 0.0
    %315 = vmatpush1.msra.mxu0 %v279
    %316 = vmatprep.subr.mxu0 0.0
    %317 = vmatpush1.msra.mxu0 %v280
    %318 = vmatprep.subr.mxu0 0.0
    %319 = vmatpush1.msra.mxu0 0.0
    %320 = vmatprep.subr.mxu0 0.0
    %321 = vmatpush1.msra.mxu0 0.0
    %322 = vmatprep.subr.mxu0 0.0
    %323 = vmatpush1.msra.mxu0 0.0
    %324 = vmatprep.subr.mxu0 0.0
    %325 = vmatpush1.msra.mxu0 0.0
    %326 = vmatprep.subr.mxu0 0.0
    %327 = vmatpush1.msra.mxu0 0.0
    %328 = vmatprep.subr.mxu0 0.0
    %329 = vmatpush1.msra.mxu0 0.0
    %330 = vmatprep.subr.mxu0 0.0
    %331 = vmatpush1.msra.mxu0 0.0
    %332 = vmatprep.subr.mxu0 0.0
    %333 = vmatpush1.msra.mxu0 0.0
    %334 = vmatprep.subr.mxu0 0.0
    %335 = vmatpush1.msra.mxu0 0.0
    %336 = vmatprep.subr.mxu0 0.0
    %337 = vmatpush1.msra.mxu0 0.0
    %338 = vmatprep.subr.mxu0 0.0
    %339 = vmatpush1.msra.mxu0 0.0
    %340 = vmatprep.subr.mxu0 0.0
    %341 = vmatpush1.msra.mxu0 0.0
    %342 = vmatprep.subr.mxu0 0.0
    %343 = vmatpush1.msra.mxu0 0.0
    %344 = vmatprep.subr.mxu0 0.0
    %345 = vmatpush1.msra.mxu0 0.0
    %346 = vmatprep.subr.mxu0 0.0
    %347 = vmatpush1.msra.mxu0 0.0
    %348 = vmatprep.subr.mxu0 0.0
    %349 = vmatpush1.msra.mxu0 0.0
    %350 = vmatprep.mubr.f32.mxu0 0.0
    %351 = vmatmul.mubr.f32.gmra.mrb[0].mxu0 %v263
    %v352 = vpop.f32.mrb[0].mxu0
    %v353 = vadd.f32 %v285, %v352
    %v354 = vpop.f32.mrb[0].mxu0
    %355 = vmatprep.mubr.f32.mxu0 0.0
    %356 = vmatmul.mubr.f32.gmra.mrb[0].mxu0 %v264
    %v357 = vpop.f32.mrb[0].mxu0
    %v358 = vadd.f32 %v285, %v357
    %v359 = vpop.f32.mrb[0].mxu0
    %360 = vdwg.mxu0
    %vm361 = vcmp.gt.f32.partialorder %v353, 0.0
    %vm362 = vcmp.gt.f32.partialorder %v358, 0.0
    %v363 = vmul.f32 %v353, 0.01
    %v364 = vmul.f32 %v358, 0.01
    %v365 = vsel %vm361, %v353, %v363
    %v366 = vsel %vm362, %v358, %v364
    %v367 = vld [vmem:[#allocation2 + $0x120] sm:$0xff]
    %v368 = vld [vmem:[#allocation2 + $0x128] sm:$0xff]
    %v369 = vld [vmem:[#allocation2 + $0x130] sm:$0xff]
    %v370 = vld [vmem:[#allocation2 + $0x138] sm:$0xff]
    %v371 = vld [vmem:[#allocation2 + $0x140] sm:$0xff]
    %v372 = vld [vmem:[#allocation2 + $0x148] sm:$0xff]
    %v373 = vld [vmem:[#allocation2 + $0x150] sm:$0xff]
    %v374 = vld [vmem:[#allocation2 + $0x158] sm:$0xff]
    %v375 = vld [vmem:[#allocation2 + $0x160] sm:$0xff]
    %v376 = vld [vmem:[#allocation2 + $0x168] sm:$0xff]
    %v377 = vld [vmem:[#allocation2 + $0x170] sm:$0xff]
    %v378 = vld [vmem:[#allocation2 + $0x178] sm:$0xff]
    %v379 = vld [vmem:[#allocation2 + $0x180] sm:$0xff]
    %v380 = vld [vmem:[#allocation2 + $0x188] sm:$0xff]
    %v381 = vld [vmem:[#allocation2 + $0x190] sm:$0xff]
    %v382 = vld [vmem:[#allocation2 + $0x198] sm:$0xff]
    %v383 = vld [vmem:[#allocation2 + $0x1b] sm:$0x1]
    %v384 = vlaneseq
    %v385 = vshrl.u32 %v384, 7
    %v386 = vsub.s32 0, %v385
    %v387 = vrot.slane %v383, %v386
    %388 = vmatprep.subr.mxu0 0.0
    %389 = vmatpush1.msra.mxu0 %v367
    %390 = vmatprep.subr.mxu0 0.0
    %391 = vmatpush1.msra.mxu0 %v368
    %392 = vmatprep.subr.mxu0 0.0
    %393 = vmatpush1.msra.mxu0 %v369
    %394 = vmatprep.subr.mxu0 0.0
    %395 = vmatpush1.msra.mxu0 %v370
    %396 = vmatprep.subr.mxu0 0.0
    %397 = vmatpush1.msra.mxu0 %v371
    %398 = vmatprep.subr.mxu0 0.0
    %399 = vmatpush1.msra.mxu0 %v372
    %400 = vmatprep.subr.mxu0 0.0
    %401 = vmatpush1.msra.mxu0 %v373
    %402 = vmatprep.subr.mxu0 0.0
    %403 = vmatpush1.msra.mxu0 %v374
    %404 = vmatprep.subr.mxu0 0.0
    %405 = vmatpush1.msra.mxu0 %v375
    %406 = vmatprep.subr.mxu0 0.0
    %407 = vmatpush1.msra.mxu0 %v376
    %408 = vmatprep.subr.mxu0 0.0
    %409 = vmatpush1.msra.mxu0 %v377
    %410 = vmatprep.subr.mxu0 0.0
    %411 = vmatpush1.msra.mxu0 %v378
    %412 = vmatprep.subr.mxu0 0.0
    %413 = vmatpush1.msra.mxu0 %v379
    %414 = vmatprep.subr.mxu0 0.0
    %415 = vmatpush1.msra.mxu0 %v380
    %416 = vmatprep.subr.mxu0 0.0
    %417 = vmatpush1.msra.mxu0 %v381
    %418 = vmatprep.subr.mxu0 0.0
    %419 = vmatpush1.msra.mxu0 %v382
    %420 = vmatprep.subr.mxu0 0.0
    %421 = vmatpush1.msra.mxu0 0.0
    %422 = vmatprep.subr.mxu0 0.0
    %423 = vmatpush1.msra.mxu0 0.0
    %424 = vmatprep.subr.mxu0 0.0
    %425 = vmatpush1.msra.mxu0 0.0
    %426 = vmatprep.subr.mxu0 0.0
    %427 = vmatpush1.msra.mxu0 0.0
    %428 = vmatprep.subr.mxu0 0.0
    %429 = vmatpush1.msra.mxu0 0.0
    %430 = vmatprep.subr.mxu0 0.0
    %431 = vmatpush1.msra.mxu0 0.0
    %432 = vmatprep.subr.mxu0 0.0
    %433 = vmatpush1.msra.mxu0 0.0
    %434 = vmatprep.subr.mxu0 0.0
    %435 = vmatpush1.msra.mxu0 0.0
    %436 = vmatprep.subr.mxu0 0.0
    %437 = vmatpush1.msra.mxu0 0.0
    %438 = vmatprep.subr.mxu0 0.0
    %439 = vmatpush1.msra.mxu0 0.0
    %440 = vmatprep.subr.mxu0 0.0
    %441 = vmatpush1.msra.mxu0 0.0
    %442 = vmatprep.subr.mxu0 0.0
    %443 = vmatpush1.msra.mxu0 0.0
    %444 = vmatprep.subr.mxu0 0.0
    %445 = vmatpush1.msra.mxu0 0.0
    %446 = vmatprep.subr.mxu0 0.0
    %447 = vmatpush1.msra.mxu0 0.0
    %448 = vmatprep.subr.mxu0 0.0
    %449 = vmatpush1.msra.mxu0 0.0
    %450 = vmatprep.subr.mxu0 0.0
    %451 = vmatpush1.msra.mxu0 0.0
    %452 = vmatprep.mubr.f32.mxu0 0.0
    %453 = vmatmul.mubr.f32.gmra.mrb[0].mxu0 %v365
    %v454 = vpop.f32.mrb[0].mxu0
    %v455 = vadd.f32 %v387, %v454
    %v456 = vpop.f32.mrb[0].mxu0
    %457 = vmatprep.mubr.f32.mxu0 0.0
    %458 = vmatmul.mubr.f32.gmra.mrb[0].mxu0 %v366
    %v459 = vpop.f32.mrb[0].mxu0
    %v460 = vadd.f32 %v387, %v459
    %v461 = vpop.f32.mrb[0].mxu0
    %462 = vdwg.mxu0
    %vm463 = vcmp.gt.f32.partialorder %v455, 0.0
    %vm464 = vcmp.gt.f32.partialorder %v460, 0.0
    %v465 = vmul.f32 %v455, 0.01
    %v466 = vmul.f32 %v460, 0.01
    %v467 = vsel %vm463, %v455, %v465
    %v468 = vsel %vm464, %v460, %v466
    %v469 = vld [vmem:[#allocation2 + $0x1a0] sm:$0xff]
    %v470 = vld [vmem:[#allocation2 + $0x1a8] sm:$0xff]
    %v471 = vld [vmem:[#allocation2 + $0x1b0] sm:$0xff]
    %v472 = vld [vmem:[#allocation2 + $0x1b8] sm:$0xff]
    %v473 = vld [vmem:[#allocation2 + $0x1c0] sm:$0xff]
    %v474 = vld [vmem:[#allocation2 + $0x1c8] sm:$0xff]
    %v475 = vld [vmem:[#allocation2 + $0x1d0] sm:$0xff]
    %v476 = vld [vmem:[#allocation2 + $0x1d8] sm:$0xff]
    %v477 = vld [vmem:[#allocation2 + $0x1e0] sm:$0xff]
    %v478 = vld [vmem:[#allocation2 + $0x1e8] sm:$0xff]
    %v479 = vld [vmem:[#allocation2 + $0x1f0] sm:$0xff]
    %v480 = vld [vmem:[#allocation2 + $0x1f8] sm:$0xff]
    %v481 = vld [vmem:[#allocation2 + $0x200] sm:$0xff]
    %v482 = vld [vmem:[#allocation2 + $0x208] sm:$0xff]
    %v483 = vld [vmem:[#allocation2 + $0x210] sm:$0xff]
    %v484 = vld [vmem:[#allocation2 + $0x218] sm:$0xff]
    %v485 = vld [vmem:[#allocation2 + $0x1c] sm:$0x1]
    %v486 = vlaneseq
    %v487 = vshrl.u32 %v486, 7
    %v488 = vsub.s32 0, %v487
    %v489 = vrot.slane %v485, %v488
    %490 = vmatprep.subr.mxu0 0.0
    %491 = vmatpush1.msra.mxu0 %v469
    %492 = vmatprep.subr.mxu0 0.0
    %493 = vmatpush1.msra.mxu0 %v470
    %494 = vmatprep.subr.mxu0 0.0
    %495 = vmatpush1.msra.mxu0 %v471
    %496 = vmatprep.subr.mxu0 0.0
    %497 = vmatpush1.msra.mxu0 %v472
    %498 = vmatprep.subr.mxu0 0.0
    %499 = vmatpush1.msra.mxu0 %v473
    %500 = vmatprep.subr.mxu0 0.0
    %501 = vmatpush1.msra.mxu0 %v474
    %502 = vmatprep.subr.mxu0 0.0
    %503 = vmatpush1.msra.mxu0 %v475
    %504 = vmatprep.subr.mxu0 0.0
    %505 = vmatpush1.msra.mxu0 %v476
    %506 = vmatprep.subr.mxu0 0.0
    %507 = vmatpush1.msra.mxu0 %v477
    %508 = vmatprep.subr.mxu0 0.0
    %509 = vmatpush1.msra.mxu0 %v478
    %510 = vmatprep.subr.mxu0 0.0
    %511 = vmatpush1.msra.mxu0 %v479
    %512 = vmatprep.subr.mxu0 0.0
    %513 = vmatpush1.msra.mxu0 %v480
    %514 = vmatprep.subr.mxu0 0.0
    %515 = vmatpush1.msra.mxu0 %v481
    %516 = vmatprep.subr.mxu0 0.0
    %517 = vmatpush1.msra.mxu0 %v482
    %518 = vmatprep.subr.mxu0 0.0
    %519 = vmatpush1.msra.mxu0 %v483
    %520 = vmatprep.subr.mxu0 0.0
    %521 = vmatpush1.msra.mxu0 %v484
    %522 = vmatprep.subr.mxu0 0.0
    %523 = vmatpush1.msra.mxu0 0.0
    %524 = vmatprep.subr.mxu0 0.0
    %525 = vmatpush1.msra.mxu0 0.0
    %526 = vmatprep.subr.mxu0 0.0
    %527 = vmatpush1.msra.mxu0 0.0
    %528 = vmatprep.subr.mxu0 0.0
    %529 = vmatpush1.msra.mxu0 0.0
    %530 = vmatprep.subr.mxu0 0.0
    %531 = vmatpush1.msra.mxu0 0.0
    %532 = vmatprep.subr.mxu0 0.0
    %533 = vmatpush1.msra.mxu0 0.0
    %534 = vmatprep.subr.mxu0 0.0
    %535 = vmatpush1.msra.mxu0 0.0
    %536 = vmatprep.subr.mxu0 0.0
    %537 = vmatpush1.msra.mxu0 0.0
    %538 = vmatprep.subr.mxu0 0.0
    %539 = vmatpush1.msra.mxu0 0.0
    %540 = vmatprep.subr.mxu0 0.0
    %541 = vmatpush1.msra.mxu0 0.0
    %542 = vmatprep.subr.mxu0 0.0
    %543 = vmatpush1.msra.mxu0 0.0
    %544 = vmatprep.subr.mxu0 0.0
    %545 = vmatpush1.msra.mxu0 0.0
    %546 = vmatprep.subr.mxu0 0.0
    %547 = vmatpush1.msra.mxu0 0.0
    %548 = vmatprep.subr.mxu0 0.0
    %549 = vmatpush1.msra.mxu0 0.0
    %550 = vmatprep.subr.mxu0 0.0
    %551 = vmatpush1.msra.mxu0 0.0
    %552 = vmatprep.subr.mxu0 0.0
    %553 = vmatpush1.msra.mxu0 0.0
    %554 = vmatprep.mubr.f32.mxu0 0.0
    %555 = vmatmul.mubr.f32.gmra.mrb[0].mxu0 %v467
    %v556 = vpop.f32.mrb[0].mxu0
    %v557 = vadd.f32 %v489, %v556
    %v558 = vpop.f32.mrb[0].mxu0
    %559 = vmatprep.mubr.f32.mxu0 0.0
    %560 = vmatmul.mubr.f32.gmra.mrb[0].mxu0 %v468
    %v561 = vpop.f32.mrb[0].mxu0
    %v562 = vadd.f32 %v489, %v561
    %v563 = vpop.f32.mrb[0].mxu0
    %564 = vdwg.mxu0
    %vm565 = vcmask 7168
    %566 = vst.msk [vmem:[%s3] sm:$0xff] %vm565, %v557
    %567 = vst.msk [vmem:[%s3 + $0x8] sm:$0xff] %vm565, %v562
    // Predicated region
    $region18: #{tpu_custom_call.1} parent=1 // pred_check
      _
    $region19: #{tpu_custom_call.1} parent=1 // pred_check_branch
      %569 = sbr.rel (0) target = $region21
    $region20: #{tpu_custom_call.1} parent=1 // pred_region
      _
    $region21: #{tpu_custom_call.1} parent=1 // pred_fallthru
      _
    // Predicated region
    $region22: #{tpu_custom_call.1} parent=1 // pred_check
      _
    $region23: #{tpu_custom_call.1} parent=1 // pred_check_branch
      %571 = sbr.rel (0) target = $region25
    $region24: #{tpu_custom_call.1} parent=1 // pred_region
      _
    $region25: #{tpu_custom_call.1} parent=1 // pred_fallthru
      _
    %572 = vsyncpa [#allocation3], 1

</llo_original>
